<compile_context>
chip_gen: v6e
topology: v6e:2x2x1
jax: 0.10.0
libtpu: 0.0.40
codegen_flags: <defaults>
</compile_context>

<pallas_src>
import math

import numpy as np

import jax
import jax.numpy as jnp
from jax.experimental import pallas as pl
from jax.experimental.pallas import tpu as pltpu

FEATURE_DIM = 528
VOL_ORIGIN = (-3.6, -2.4, 1.14)
VOXEL_SIZE = 0.04
D_PER_COORD = FEATURE_DIM // 3          # 176 features per coordinate (x / y / z)
N_FREQ = D_PER_COORD // 2               # 88 frequencies (div_term length)
NEG_LOG_SCALE = -math.log(10000.0) / float(D_PER_COORD)


def _column_constants():
    """Per-output-column constants (float64 -> float32), computed once.

    out[:, col] = sin(x * sx[col] + y * sy[col] + z * sz[col] + bias[col])

    Folds in: voxelization (p - origin)/voxel, the frequency div_term,
    the sin/cos split (cos(a) == sin(a + pi/2)), and the x/y/z slab selection.
    Output column layout matches the reference:
    [sin(x·d) | cos(x·d) | sin(y·d) | cos(y·d) | sin(z·d) | cos(z·d)], each 88 wide.
    """
    col = np.arange(FEATURE_DIM)
    coord = col // D_PER_COORD                       # 0: x, 1: y, 2: z
    k = col % N_FREQ                                 # frequency index 0..87
    div = np.exp((2.0 * k) * NEG_LOG_SCALE)          # == exp(arange(0,176,2) * -ln(1e4)/176)
    scale = div / VOXEL_SIZE
    phase = np.where((col % D_PER_COORD) < N_FREQ, 0.0, np.pi / 2.0)
    origin = np.asarray(VOL_ORIGIN, np.float64)

    sx = np.where(coord == 0, scale, 0.0)
    sy = np.where(coord == 1, scale, 0.0)
    sz = np.where(coord == 2, scale, 0.0)
    bias = -origin[coord] * scale + phase

    as_row = lambda a: np.asarray(a, np.float32).reshape(1, FEATURE_DIM)
    return as_row(sx), as_row(sy), as_row(sz), as_row(bias)


_SX, _SY, _SZ, _BIAS = _column_constants()


def vpe_kernel(xyz_ref, sx_ref, sy_ref, sz_ref, bias_ref, out_ref):
    # xyz_ref: (1, TN, 3); sx/sy/sz/bias: (1, 528); out_ref: (1, TN, 528)
    xyz = xyz_ref[0]                                  # (TN, 3)
    x = xyz[:, 0:1]                                   # (TN, 1)
    y = xyz[:, 1:2]
    z = xyz[:, 2:3]
    # Wide path: 3 mul + 3 add + single sin over (TN, 528).
    angle = (x * sx_ref[...] + y * sy_ref[...] + z * sz_ref[...]) + bias_ref[...]
    out_ref[0] = jnp.sin(angle).astype(out_ref.dtype)


def volumetric_position_encoding(xyz, *, tile_n=None, out_dtype=jnp.float32):
    """xyz: [B, N, 3] float32 -> position code [B, N, 528] (out_dtype, default f32)."""
    B, N, C = xyz.shape
    assert C == 3

    if tile_n is None:
        # ~2 MB output block per grid step: big enough to amortize per-step
        # overhead, small enough to double-buffer on v5e/v6e/v7x scoped VMEM.
        tile_n = min(1024, max(8, ((N + 7) // 8) * 8))
    assert tile_n > 0 and tile_n % 8 == 0

    n_tiles = pl.cdiv(N, tile_n)
    n_pad = n_tiles * tile_n
    if n_pad != N:                                   # ragged tail: pad then slice
        xyz = jnp.pad(xyz, ((0, 0), (0, n_pad - N), (0, 0)))

    sx = jnp.asarray(_SX)
    sy = jnp.asarray(_SY)
    sz = jnp.asarray(_SZ)
    bias = jnp.asarray(_BIAS)

    const_spec = pl.BlockSpec((1, FEATURE_DIM), lambda b, n: (0, 0))

    out_block_bytes = tile_n * FEATURE_DIM * jnp.dtype(out_dtype).itemsize
    in_block_bytes = tile_n * 3 * xyz.dtype.itemsize
    # Explicit VMEM budget so tile_n sweeps don't hit silent scoped-VMEM limits;
    # headroom for double-buffered input/output blocks + resident constants.
    vmem_limit = int(max(16 << 20, 3 * (out_block_bytes + in_block_bytes) + (1 << 20)))

    out = pl.pallas_call(
        vpe_kernel,
        out_shape=jax.ShapeDtypeStruct((B, n_pad, FEATURE_DIM), out_dtype),
        grid_spec=pltpu.PrefetchScalarGridSpec(
            num_scalar_prefetch=0,
            grid=(B, n_tiles),
            in_specs=[
                pl.BlockSpec((1, tile_n, 3), lambda b, n: (b, n, 0)),
                const_spec, const_spec, const_spec, const_spec,
            ],
            out_specs=pl.BlockSpec((1, tile_n, FEATURE_DIM),
                                   lambda b, n: (b, n, 0)),
        ),
        compiler_params=pltpu.CompilerParams(
            dimension_semantics=("parallel", "parallel"),
            vmem_limit_bytes=vmem_limit),
    )(xyz, sx, sy, sz, bias)

    if n_pad != N:
        out = out[:, :N]
    return out


def _reference(xyz):
    """Pure-JAX transcription of the PyTorch forward (sinusoidal branch)."""
    origin = jnp.asarray(VOL_ORIGIN, jnp.float32).reshape(1, 1, 3)
    vox = (xyz - origin) / VOXEL_SIZE
    xp, yp, zp = vox[..., 0:1], vox[..., 1:2], vox[..., 2:3]
    div = jnp.exp(jnp.arange(0, D_PER_COORD, 2, dtype=jnp.float32)
                  * NEG_LOG_SCALE).reshape(1, 1, -1)
    return jnp.concatenate(
        [jnp.sin(xp * div), jnp.cos(xp * div),
         jnp.sin(yp * div), jnp.cos(yp * div),
         jnp.sin(zp * div), jnp.cos(zp * div)], axis=-1)


if __name__ == "__main__":
    key = jax.random.PRNGKey(0)

    # Small shape matching the module's forward signature: XYZ = [B, N, 3].
    B, N = 2, 8
    xyz = jax.random.uniform(key, (B, N, 3), jnp.float32, minval=-3.0, maxval=2.5)

    out = volumetric_position_encoding(xyz)
    out = jax.block_until_ready(out)
    ref = _reference(xyz)
    assert out.shape == (B, N, FEATURE_DIM)
    assert out.dtype == jnp.float32
    assert jnp.allclose(out, ref, atol=2e-3, rtol=2e-3), "mismatch vs pure-JAX reference"

    # Ragged-N path (N not a multiple of 8 / tile_n): pad + slice handling.
    key2 = jax.random.PRNGKey(1)
    xyz2 = jax.random.uniform(key2, (1, 50, 3), jnp.float32, minval=-3.0, maxval=2.5)
    out2 = jax.block_until_ready(volumetric_position_encoding(xyz2))
    assert out2.shape == (1, 50, FEATURE_DIM)
    assert jnp.allclose(out2, _reference(xyz2), atol=2e-3, rtol=2e-3), "ragged-N mismatch"

    print("KERNEL_OK")
</pallas_src>

<mosaic_0001>
module attributes {stable_mosaic.version = 11 : i64} {
  func.func @vpe_kernel(%arg0: i32, %arg1: i32, %arg2: memref<1x8x3xf32, #tpu.memory_space<vmem>>, %arg3: memref<1x528xf32, #tpu.memory_space<vmem>>, %arg4: memref<1x528xf32, #tpu.memory_space<vmem>>, %arg5: memref<1x528xf32, #tpu.memory_space<vmem>>, %arg6: memref<1x528xf32, #tpu.memory_space<vmem>>, %arg7: memref<1x8x528xf32, #tpu.memory_space<vmem>>) attributes {dimension_semantics = [#tpu.dimension_semantics<parallel>, #tpu.dimension_semantics<parallel>], iteration_bounds = array<i64: 2, 1>, scalar_prefetch = 0 : i64, scratch_operands = 0 : i64, tpu.core_type = #tpu.core_type<tc>, window_params = [{transform_indices = @transform_0, window_bounds = array<i64: 1, 8, 3>}, {pipeline_mode = #tpu.pipeline_mode<synchronous>, transform_indices = @transform_1, window_bounds = array<i64: 1, 528>}, {pipeline_mode = #tpu.pipeline_mode<synchronous>, transform_indices = @transform_2, window_bounds = array<i64: 1, 528>}, {pipeline_mode = #tpu.pipeline_mode<synchronous>, transform_indices = @transform_3, window_bounds = array<i64: 1, 528>}, {pipeline_mode = #tpu.pipeline_mode<synchronous>, transform_indices = @transform_4, window_bounds = array<i64: 1, 528>}, {transform_indices = @transform_5, window_bounds = array<i64: 1, 8, 528>}]} {
    %c0 = arith.constant 0 : index
    %c0_0 = arith.constant 0 : index
    %c0_1 = arith.constant 0 : index
    %0 = vector.load %arg2[%c0, %c0_0, %c0_1] : memref<1x8x3xf32, #tpu.memory_space<vmem>>, vector<1x8x3xf32>
    %1 = vector.shape_cast %0 : vector<1x8x3xf32> to vector<8x3xf32>
    %2 = vector.extract_strided_slice %1 {offsets = [0, 0], sizes = [8, 1], strides = [1, 1]} : vector<8x3xf32> to vector<8x1xf32>
    %3 = vector.extract_strided_slice %1 {offsets = [0, 1], sizes = [8, 1], strides = [1, 1]} : vector<8x3xf32> to vector<8x1xf32>
    %4 = vector.extract_strided_slice %1 {offsets = [0, 2], sizes = [8, 1], strides = [1, 1]} : vector<8x3xf32> to vector<8x1xf32>
    %c0_2 = arith.constant 0 : index
    %c0_3 = arith.constant 0 : index
    %5 = vector.load %arg3[%c0_2, %c0_3] : memref<1x528xf32, #tpu.memory_space<vmem>>, vector<1x528xf32>
    %6 = vector.broadcast %2 : vector<8x1xf32> to vector<8x528xf32>
    %7 = vector.broadcast %5 : vector<1x528xf32> to vector<8x528xf32>
    %8 = arith.mulf %6, %7 : vector<8x528xf32>
    %c0_4 = arith.constant 0 : index
    %c0_5 = arith.constant 0 : index
    %9 = vector.load %arg4[%c0_4, %c0_5] : memref<1x528xf32, #tpu.memory_space<vmem>>, vector<1x528xf32>
    %10 = vector.broadcast %3 : vector<8x1xf32> to vector<8x528xf32>
    %11 = vector.broadcast %9 : vector<1x528xf32> to vector<8x528xf32>
    %12 = arith.mulf %10, %11 : vector<8x528xf32>
    %13 = arith.addf %8, %12 : vector<8x528xf32>
    %c0_6 = arith.constant 0 : index
    %c0_7 = arith.constant 0 : index
    %14 = vector.load %arg5[%c0_6, %c0_7] : memref<1x528xf32, #tpu.memory_space<vmem>>, vector<1x528xf32>
    %15 = vector.broadcast %4 : vector<8x1xf32> to vector<8x528xf32>
    %16 = vector.broadcast %14 : vector<1x528xf32> to vector<8x528xf32>
    %17 = arith.mulf %15, %16 : vector<8x528xf32>
    %18 = arith.addf %13, %17 : vector<8x528xf32>
    %c0_8 = arith.constant 0 : index
    %c0_9 = arith.constant 0 : index
    %19 = vector.load %arg6[%c0_8, %c0_9] : memref<1x528xf32, #tpu.memory_space<vmem>>, vector<1x528xf32>
    %20 = vector.broadcast %19 : vector<1x528xf32> to vector<8x528xf32>
    %21 = arith.addf %18, %20 : vector<8x528xf32>
    %22 = math.sin %21 : vector<8x528xf32>
    %c0_10 = arith.constant 0 : index
    %c0_11 = arith.constant 0 : index
    %c0_12 = arith.constant 0 : index
    %23 = vector.load %arg7[%c0_10, %c0_11, %c0_12] : memref<1x8x528xf32, #tpu.memory_space<vmem>>, vector<1x8x528xf32>
    %24 = vector.shape_cast %23 : vector<1x8x528xf32> to vector<8x528xf32>
    %25 = vector.shape_cast %22 : vector<8x528xf32> to vector<1x8x528xf32>
    tpu.vector_store %arg7[%c0_10, %c0_11, %c0_12], %25 {strides = array<i32>} : memref<1x8x528xf32, #tpu.memory_space<vmem>>, vector<1x8x528xf32>,
    return
  }
  func.func @transform_0(%arg0: i32, %arg1: i32) -> (i32, i32, i32) {
    %c0_i32 = arith.constant 0 : i32
    %c0_i32_0 = arith.constant 0 : i32
    return %arg0, %arg1, %c0_i32 : i32, i32, i32
  }
  func.func @transform_1(%arg0: i32, %arg1: i32) -> (i32, i32) {
    %c0_i32 = arith.constant 0 : i32
    %c0_i32_0 = arith.constant 0 : i32
    %c0_i32_1 = arith.constant 0 : i32
    return %c0_i32, %c0_i32_0 : i32, i32
  }
  func.func @transform_2(%arg0: i32, %arg1: i32) -> (i32, i32) {
    %c0_i32 = arith.constant 0 : i32
    %c0_i32_0 = arith.constant 0 : i32
    %c0_i32_1 = arith.constant 0 : i32
    return %c0_i32, %c0_i32_0 : i32, i32
  }
  func.func @transform_3(%arg0: i32, %arg1: i32) -> (i32, i32) {
    %c0_i32 = arith.constant 0 : i32
    %c0_i32_0 = arith.constant 0 : i32
    %c0_i32_1 = arith.constant 0 : i32
    return %c0_i32, %c0_i32_0 : i32, i32
  }
  func.func @transform_4(%arg0: i32, %arg1: i32) -> (i32, i32) {
    %c0_i32 = arith.constant 0 : i32
    %c0_i32_0 = arith.constant 0 : i32
    %c0_i32_1 = arith.constant 0 : i32
    return %c0_i32, %c0_i32_0 : i32, i32
  }
  func.func @transform_5(%arg0: i32, %arg1: i32) -> (i32, i32, i32) {
    %c0_i32 = arith.constant 0 : i32
    %c0_i32_0 = arith.constant 0 : i32
    return %arg0, %arg1, %c0_i32 : i32, i32, i32
  }
}

</mosaic_0001>

<llo_original>
// kernel: tpu_custom_call.1
$region0: #{tpu_custom_call.1}
  #allocation0 [shape = 'u32[]', space=smem, size = 0x4, offset = 0x4, fixed_abs, tag = 'smem constant byte address 0x4 - core index']
  #allocation1 [shape = 'u32[144,128]{1,0:T(1,128)}', space=vmem, size = 0x12000, scoped, tag = 'internal scratch']
  %s0 = inlined_call_operand.vmem [shape: f32[2,8,3], index: 0, kind: input, shape index: {}]
  %s1 = inlined_call_operand.vmem [shape: f32[1,528], index: 1, kind: input, shape index: {}]
  %s2 = inlined_call_operand.vmem [shape: f32[1,528], index: 2, kind: input, shape index: {}]
  %s3 = inlined_call_operand.vmem [shape: f32[1,528], index: 3, kind: input, shape index: {}]
  %s4 = inlined_call_operand.vmem [shape: f32[1,528], index: 4, kind: input, shape index: {}]
  %s5 = inlined_call_operand.hbm [shape: f32[2,8,528], index: 5, kind: output, shape index: {}]
  %s6 = sld [smem:[#allocation0]]
  $region53: #{tpu_custom_call.1} parent=0
    _
  %s8 = ssub.s32 1, %s6
  %s9 = scalar_select 0, %s8, %s6
  $region1: #{tpu_custom_call.1} parent=0
    #allocation2 [shape = 'u8[40960]{0}', space=vmem, size = 0xa000, scoped, tag = 'output window, operand 0']
    #allocation3 [shape = 's32[2]{0}', space=sflag, size = 0x8, scoped, tag = 'scoped memory for tpu_custom_call.1']
    %10 = vsyncpa [#allocation3], 0
    %s11 = scalar_lea.sflag [#allocation3], 1
    %12 = vsyncpa %s11, 0
    loop: start=0, step=1, limit=4
    $region2: #{tpu_custom_call.1} parent=1 // loop_pre_header
      _
    $region3: #{tpu_custom_call.1} parent=1 // loop_header
      %s14 = sphi 0, %s18
      %p15 = scmp.ge.s32.totalorder %s14, 4
      %s21 = sphi 0, %s33
      %s22 = sphi 0, %s29
      %s23 = sphi 0, %s21
      %s24 = sphi 0, %s22
      %s25 = sphi 0, %s23
      %s26 = sphi 0, %s24
      %s38 = sphi 0, %s40
      %s41 = sphi 0, %s38
      %s42 = sphi 0, %s41
      %s58 = sphi 0, %s42
      %s62 = sphi 0, %s62
      %s64 = sphi 0, %s62
      %s65 = sphi 0, %s64
      %s79 = sphi 0, %s65
      %s83 = sphi 0, %s83
      %s85 = sphi 0, %s83
      %s86 = sphi 0, %s85
      %s100 = sphi 0, %s86
      %s104 = sphi 0, %s104
      %s106 = sphi 0, %s104
      %s107 = sphi 0, %s106
      %s121 = sphi 0, %s107
      %s125 = sphi 0, %s125
      %s127 = sphi 0, %s125
      %s128 = sphi 0, %s127
      %s142 = sphi 0, %s128
      %s150 = sphi 0, %s152
      %s153 = sphi 0, %s150
      %s154 = sphi 0, %s153
      %s170 = sphi 0, %s154
    $region4: #{tpu_custom_call.1} parent=1 // loop_header_branch
      %17 = sbr.rel (%p15) target = $region8
    $region5: #{tpu_custom_call.1} parent=1 // loop_body
      %s19 = ssub.s32 %s14, 1
      %s20 = ssub.s32 %s14, 2
      %s27 = sadd.s32 1, %s22
      %p28 = scmp.ge.s32.totalorder %s27, 1
      %s29 = scalar_select %p28, 0, %s27
      %s30 = sadd.s32 1, %s21
      %s31 = scalar_select %p28, %s30, %s21
      %p32 = scmp.ge.s32.totalorder %s31, 2
      %s33 = scalar_select %p32, 0, %s31
      %s34 = ssub.s32 %s21, %s33
      %s35 = ssub.s32 %s22, %s29
      %s36 = sor.u32 %s34, %s35
      %p37 = scmp.eq.s32.totalorder %s36, 0
      %s39 = sadd.s32 %s38, 1
      %s40 = scalar_select %p37, %s38, %s39
      %p43 = pneg %p37
      %p44 = scmp.eq.s32.totalorder %s14, 1
      %p45 = por %p43, %p44
      %p46 = scmp.ne.s32.totalorder %s38, %s41
      %p47 = scmp.eq.s32.totalorder %s14, 0
      %p48 = por %p46, %p47
      %p49 = scmp.ne.s32.totalorder %s38, %s41
      %p50 = scmp.eq.s32.totalorder %s19, 1
      %p51 = por %p49, %p50
      %p52 = scmp.ne.s32.totalorder %s41, %s42
      %p53 = scmp.eq.s32.totalorder %s19, 0
      %p54 = por %p52, %p53
      %p55 = scmp.ne.s32.totalorder %s41, %s42
      %p56 = scmp.eq.s32.totalorder %s20, 1
      %p57 = por %p55, %p56
      %p59 = scmp.ne.s32.totalorder %s42, %s58
      %p60 = scmp.eq.s32.totalorder %s20, 0
      %p61 = por %p59, %p60
      %s63 = sadd.s32 %s62, 1
      %p66 = scmp.eq.s32.totalorder %s14, 1
      %p67 = scmp.ne.s32.totalorder %s62, %s64
      %p68 = scmp.eq.s32.totalorder %s14, 0
      %p69 = por %p67, %p68
      %p70 = scmp.ne.s32.totalorder %s62, %s64
      %p71 = scmp.eq.s32.totalorder %s19, 1
      %p72 = por %p70, %p71
      %p73 = scmp.ne.s32.totalorder %s64, %s65
      %p74 = scmp.eq.s32.totalorder %s19, 0
      %p75 = por %p73, %p74
      %p76 = scmp.ne.s32.totalorder %s64, %s65
      %p77 = scmp.eq.s32.totalorder %s20, 1
      %p78 = por %p76, %p77
      %p80 = scmp.ne.s32.totalorder %s65, %s79
      %p81 = scmp.eq.s32.totalorder %s20, 0
      %p82 = por %p80, %p81
      %s84 = sadd.s32 %s83, 1
      %p87 = scmp.eq.s32.totalorder %s14, 1
      %p88 = scmp.ne.s32.totalorder %s83, %s85
      %p89 = scmp.eq.s32.totalorder %s14, 0
      %p90 = por %p88, %p89
      %p91 = scmp.ne.s32.totalorder %s83, %s85
      %p92 = scmp.eq.s32.totalorder %s19, 1
      %p93 = por %p91, %p92
      %p94 = scmp.ne.s32.totalorder %s85, %s86
      %p95 = scmp.eq.s32.totalorder %s19, 0
      %p96 = por %p94, %p95
      %p97 = scmp.ne.s32.totalorder %s85, %s86
      %p98 = scmp.eq.s32.totalorder %s20, 1
      %p99 = por %p97, %p98
      %p101 = scmp.ne.s32.totalorder %s86, %s100
      %p102 = scmp.eq.s32.totalorder %s20, 0
      %p103 = por %p101, %p102
      %s105 = sadd.s32 %s104, 1
      %p108 = scmp.eq.s32.totalorder %s14, 1
      %p109 = scmp.ne.s32.totalorder %s104, %s106
      %p110 = scmp.eq.s32.totalorder %s14, 0
      %p111 = por %p109, %p110
      %p112 = scmp.ne.s32.totalorder %s104, %s106
      %p113 = scmp.eq.s32.totalorder %s19, 1
      %p114 = por %p112, %p113
      %p115 = scmp.ne.s32.totalorder %s106, %s107
      %p116 = scmp.eq.s32.totalorder %s19, 0
      %p117 = por %p115, %p116
      %p118 = scmp.ne.s32.totalorder %s106, %s107
      %p119 = scmp.eq.s32.totalorder %s20, 1
      %p120 = por %p118, %p119
      %p122 = scmp.ne.s32.totalorder %s107, %s121
      %p123 = scmp.eq.s32.totalorder %s20, 0
      %p124 = por %p122, %p123
      %s126 = sadd.s32 %s125, 1
      %p129 = scmp.eq.s32.totalorder %s14, 1
      %p130 = scmp.ne.s32.totalorder %s125, %s127
      %p131 = scmp.eq.s32.totalorder %s14, 0
      %p132 = por %p130, %p131
      %p133 = scmp.ne.s32.totalorder %s125, %s127
      %p134 = scmp.eq.s32.totalorder %s19, 1
      %p135 = por %p133, %p134
      %p136 = scmp.ne.s32.totalorder %s127, %s128
      %p137 = scmp.eq.s32.totalorder %s19, 0
      %p138 = por %p136, %p137
      %p139 = scmp.ne.s32.totalorder %s127, %s128
      %p140 = scmp.eq.s32.totalorder %s20, 1
      %p141 = por %p139, %p140
      %p143 = scmp.ne.s32.totalorder %s128, %s142
      %p144 = scmp.eq.s32.totalorder %s20, 0
      %p145 = por %p143, %p144
      %s146 = ssub.s32 %s21, %s33
      %s147 = ssub.s32 %s22, %s29
      %s148 = sor.u32 %s146, %s147
      %p149 = scmp.eq.s32.totalorder %s148, 0
      %s151 = sadd.s32 %s150, 1
      %s152 = scalar_select %p149, %s150, %s151
      %p155 = pneg %p149
      %p156 = scmp.eq.s32.totalorder %s14, 1
      %p157 = por %p155, %p156
      %p158 = scmp.ne.s32.totalorder %s150, %s153
      %p159 = scmp.eq.s32.totalorder %s14, 0
      %p160 = por %p158, %p159
      %p161 = scmp.ne.s32.totalorder %s150, %s153
      %p162 = scmp.eq.s32.totalorder %s19, 1
      %p163 = por %p161, %p162
      %p164 = scmp.ne.s32.totalorder %s153, %s154
      %p165 = scmp.eq.s32.totalorder %s19, 0
      %p166 = por %p164, %p165
      %p167 = scmp.ne.s32.totalorder %s153, %s154
      %p168 = scmp.eq.s32.totalorder %s20, 1
      %p169 = por %p167, %p168
      %p171 = scmp.ne.s32.totalorder %s154, %s170
      %p172 = scmp.eq.s32.totalorder %s20, 0
      %p173 = por %p171, %p172
      %p174 = scmp.le.s32.totalorder 1, %s14
      %p175 = scmp.lt.s32.totalorder %s14, 3
      %p176 = pnand %p174, %p175
      %p177 = pneg %p176
      // Predicated region
      $region9: #{tpu_custom_call.1} parent=5 // pred_check
        _
      $region10: #{tpu_custom_call.1} parent=5 // pred_check_branch
        %179 = sbr.rel (%p176) target = $region12
      $region11: #{tpu_custom_call.1} parent=5 // pred_region
        %s180 = ssub.s32 %s14, 1
        // Predicated region
        $region13: #{tpu_custom_call.1} parent=11 // pred_check
          %p181 = pneg %p75
        $region14: #{tpu_custom_call.1} parent=11 // pred_check_branch
          %183 = sbr.rel (%p181) target = $region16
        $region15: #{tpu_custom_call.1} parent=11 // pred_region
          _
        $region16: #{tpu_custom_call.1} parent=11 // pred_fallthru
          _
        // Predicated region
        $region17: #{tpu_custom_call.1} parent=11 // pred_check
          %p184 = pneg %p96
        $region18: #{tpu_custom_call.1} parent=11 // pred_check_branch
          %186 = sbr.rel (%p184) target = $region20
        $region19: #{tpu_custom_call.1} parent=11 // pred_region
          _
        $region20: #{tpu_custom_call.1} parent=11 // pred_fallthru
          _
        // Predicated region
        $region21: #{tpu_custom_call.1} parent=11 // pred_check
          %p187 = pneg %p117
        $region22: #{tpu_custom_call.1} parent=11 // pred_check_branch
          %189 = sbr.rel (%p187) target = $region24
        $region23: #{tpu_custom_call.1} parent=11 // pred_region
          _
        $region24: #{tpu_custom_call.1} parent=11 // pred_fallthru
          _
        // Predicated region
        $region25: #{tpu_custom_call.1} parent=11 // pred_check
          %p190 = pneg %p138
        $region26: #{tpu_custom_call.1} parent=11 // pred_check_branch
          %192 = sbr.rel (%p190) target = $region28
        $region27: #{tpu_custom_call.1} parent=11 // pred_region
          _
        $region28: #{tpu_custom_call.1} parent=11 // pred_fallthru
          _
      $region12: #{tpu_custom_call.1} parent=5 // pred_fallthru
        _
      %p193 = scmp.lt.s32.totalorder %s14, 2
      // Predicated region
      $region29: #{tpu_custom_call.1} parent=5 // pred_check
        %p194 = pneg %p193
      $region30: #{tpu_custom_call.1} parent=5 // pred_check_branch
        %196 = sbr.rel (%p194) target = $region32
      $region31: #{tpu_custom_call.1} parent=5 // pred_region
        // Predicated region
        $region33: #{tpu_custom_call.1} parent=31 // pred_check
          %p197 = pneg %p48
        $region34: #{tpu_custom_call.1} parent=31 // pred_check_branch
          %199 = sbr.rel (%p197) target = $region36
        $region35: #{tpu_custom_call.1} parent=31 // pred_region
          %p200 = scmp.lt.s32.totalorder %s21, 1
          %s201 = scalar_select %p200, %s21, 1
          %p202 = scmp.lt.s32.totalorder %s22, 0
          %s203 = scalar_select %p202, %s22, 0
          %s204 = sadd.s32 %s203, %s201
          %s205 = smul.addr %s204, 8
          %s206 = scalar_lea.vmem %s0, %s205
        $region36: #{tpu_custom_call.1} parent=31 // pred_fallthru
          _
      $region32: #{tpu_custom_call.1} parent=5 // pred_fallthru
        _
      %p207 = scmp.le.s32.totalorder 1, %s14
      %p208 = scmp.lt.s32.totalorder %s14, 3
      %p209 = pnand %p207, %p208
      %p210 = pneg %p209
      // Predicated region
      $region37: #{tpu_custom_call.1} parent=5 // pred_check
        _
      $region38: #{tpu_custom_call.1} parent=5 // pred_check_branch
        %212 = sbr.rel (%p209) target = $region40
      $region39: #{tpu_custom_call.1} parent=5 // pred_region
        %s213 = ssub.s32 %s14, 1
        %p214 = scmp.lt.s32.totalorder %s23, 1
        %s215 = scalar_select %p214, %s23, 1
        %p216 = scmp.lt.s32.totalorder %s24, 0
        %s217 = scalar_select %p216, %s24, 0
        %s218 = sadd.s32 %s217, %s215
        %s219 = smul.addr %s218, 8
        %s220 = scalar_lea.vmem %s0, %s219
        %p221 = pneg %p54
        %p222 = pneg %p51
        %p223 = pneg %p75
        %p224 = pneg %p72
        %p225 = pneg %p96
        %p226 = pneg %p93
        %p227 = pneg %p117
        %p228 = pneg %p114
        %p229 = pneg %p138
        %p230 = pneg %p135
        %p231 = pneg %p166
        %p232 = pneg %p163
        %s233 = sand.u32 %s153, 1
        %s234 = scalar_lea.sflag [#allocation3], %s233
        %s235 = sand.u32 %s153, 1
        %s236 = smul.addr %s235, 40
        %s237 = scalar_lea.vmem [#allocation2], %s236
        %p238 = scmp.lt.s32.totalorder %s23, 1
        %s239 = scalar_select %p238, %s23, 1
        %p240 = scmp.lt.s32.totalorder %s24, 0
        %s241 = scalar_select %p240, %s24, 0
        %s242 = sadd.s32 %s241, %s239
        %s243 = smul.addr %s242, 8
        %s244 = scalar_lea.vmem %s0, %s243
        %v245 = vld [vmem:[%s244] sm:$0xff]
        %v246 = vld [vmem:[%s1] sm:$0x1f]
        %248 = vset.pattern.permute.xlu0 0
        %249 = vperm.xlu0 %248, %v245
        %v250 = vpop.permute.xlu0 %249
        %v253 = vlaneseq
        %v254 = vshrl.u32 %v253, 7
        %v255 = vsub.s32 0, %v254
        %v256 = vrot.slane %v246, %v255
        %v257 = vlaneseq
        %v258 = vshrl.u32 %v257, 7
        %v259 = vsub.s32 1, %v258
        %v260 = vrot.slane %v246, %v259
        %v261 = vlaneseq
        %v262 = vshrl.u32 %v261, 7
        %v263 = vsub.s32 2, %v262
        %v264 = vrot.slane %v246, %v263
        %v265 = vlaneseq
        %v266 = vshrl.u32 %v265, 7
        %v267 = vsub.s32 3, %v266
        %v268 = vrot.slane %v246, %v267
        %v269 = vlaneseq
        %v270 = vshrl.u32 %v269, 7
        %v271 = vsub.s32 4, %v270
        %v272 = vrot.slane %v246, %v271
        %v278 = vmul.f32 %v250, %v256
        %v279 = vmul.f32 %v250, %v260
        %v280 = vmul.f32 %v250, %v264
        %v281 = vmul.f32 %v250, %v268
        %v282 = vmul.f32 %v250, %v272
        %v283 = vld [vmem:[%s2] sm:$0x1f]
        %284 = vset.pattern.permute.xlu0 1
        %285 = vperm.xlu0 %284, %v245
        %v286 = vpop.permute.xlu0 %285
        %v289 = vlaneseq
        %v290 = vshrl.u32 %v289, 7
        %v291 = vsub.s32 0, %v290
        %v292 = vrot.slane %v283, %v291
        %v293 = vlaneseq
        %v294 = vshrl.u32 %v293, 7
        %v295 = vsub.s32 1, %v294
        %v296 = vrot.slane %v283, %v295
        %v297 = vlaneseq
        %v298 = vshrl.u32 %v297, 7
        %v299 = vsub.s32 2, %v298
        %v300 = vrot.slane %v283, %v299
        %v301 = vlaneseq
        %v302 = vshrl.u32 %v301, 7
        %v303 = vsub.s32 3, %v302
        %v304 = vrot.slane %v283, %v303
        %v305 = vlaneseq
        %v306 = vshrl.u32 %v305, 7
        %v307 = vsub.s32 4, %v306
        %v308 = vrot.slane %v283, %v307
        %v314 = vmul.f32 %v286, %v292
        %v315 = vmul.f32 %v286, %v296
        %v316 = vmul.f32 %v286, %v300
        %v317 = vmul.f32 %v286, %v304
        %v318 = vmul.f32 %v286, %v308
        %v319 = vadd.f32 %v278, %v314
        %v320 = vadd.f32 %v279, %v315
        %v321 = vadd.f32 %v280, %v316
        %v322 = vadd.f32 %v281, %v317
        %v323 = vadd.f32 %v282, %v318
        %v324 = vld [vmem:[%s3] sm:$0x1f]
        %325 = vset.pattern.permute.xlu0 2
        %326 = vperm.xlu0 %325, %v245
        %v327 = vpop.permute.xlu0 %326
        %v330 = vlaneseq
        %v331 = vshrl.u32 %v330, 7
        %v332 = vsub.s32 0, %v331
        %v333 = vrot.slane %v324, %v332
        %v334 = vlaneseq
        %v335 = vshrl.u32 %v334, 7
        %v336 = vsub.s32 1, %v335
        %v337 = vrot.slane %v324, %v336
        %v338 = vlaneseq
        %v339 = vshrl.u32 %v338, 7
        %v340 = vsub.s32 2, %v339
        %v341 = vrot.slane %v324, %v340
        %v342 = vlaneseq
        %v343 = vshrl.u32 %v342, 7
        %v344 = vsub.s32 3, %v343
        %v345 = vrot.slane %v324, %v344
        %v346 = vlaneseq
        %v347 = vshrl.u32 %v346, 7
        %v348 = vsub.s32 4, %v347
        %v349 = vrot.slane %v324, %v348
        %v355 = vmul.f32 %v327, %v333
        %v356 = vmul.f32 %v327, %v337
        %v357 = vmul.f32 %v327, %v341
        %v358 = vmul.f32 %v327, %v345
        %v359 = vmul.f32 %v327, %v349
        %v360 = vadd.f32 %v319, %v355
        %v361 = vadd.f32 %v320, %v356
        %v362 = vadd.f32 %v321, %v357
        %v363 = vadd.f32 %v322, %v358
        %v364 = vadd.f32 %v323, %v359
        %v365 = vld [vmem:[%s4] sm:$0x1f]
        %v367 = vlaneseq
        %v368 = vshrl.u32 %v367, 7
        %v369 = vsub.s32 0, %v368
        %v370 = vrot.slane %v365, %v369
        %v371 = vlaneseq
        %v372 = vshrl.u32 %v371, 7
        %v373 = vsub.s32 1, %v372
        %v374 = vrot.slane %v365, %v373
        %v375 = vlaneseq
        %v376 = vshrl.u32 %v375, 7
        %v377 = vsub.s32 2, %v376
        %v378 = vrot.slane %v365, %v377
        %v379 = vlaneseq
        %v380 = vshrl.u32 %v379, 7
        %v381 = vsub.s32 3, %v380
        %v382 = vrot.slane %v365, %v381
        %v383 = vlaneseq
        %v384 = vshrl.u32 %v383, 7
        %v385 = vsub.s32 4, %v384
        %v386 = vrot.slane %v365, %v385
        %v392 = vadd.f32 %v360, %v370
        %v393 = vadd.f32 %v361, %v374
        %v394 = vadd.f32 %v362, %v378
        %v395 = vadd.f32 %v363, %v382
        %v396 = vadd.f32 %v364, %v386
        %v397 = vand.u32 2147483647, %v392
        %vm398 = vcmp.le.f32.partialorder %v397, 0.7853982
        %vm399 = vcmp.lt.s32.totalorder %v392, 0
        %v400 = vand.u32 %v392, 2139095040
        %v401 = vshrl.u32 %v400, 23
        %v402 = vsub.s32 %v401, 127
        %v403 = vand.u32 2147483647, %v392
        %v404 = vand.u32 %v403, 8388607
        %v405 = vor.u32 %v404, 8388608
        %v406 = vsub.s32 0, %v405
        %v407 = vadd.s32 %v402, 1
        %vm408 = vcmp.gt.s32.totalorder %v407, 0
        %v409 = vsel %vm408, %v407, 0
        %v410 = vshrl.u32 %v409, 5
        %v411 = vand.u32 %v409, 31
        %v412 = vsub.s32 32, %v411
        %v413 = vshrl.u32 683565275, %v412
        %v414 = vshll.u32 683565275, %v411
        %v415 = vshrl.u32 2475754826, %v412
        %v416 = vor.u32 %v414, %v415
        %v417 = vshll.u32 2475754826, %v411
        %v418 = vshrl.u32 2131351028, %v412
        %v419 = vor.u32 %v417, %v418
        %v420 = vshll.u32 2131351028, %v411
        %v421 = vshrl.u32 2102212464, %v412
        %v422 = vor.u32 %v420, %v421
        %v423 = vshll.u32 2102212464, %v411
        %v424 = vshrl.u32 920167782, %v412
        %v425 = vor.u32 %v423, %v424
        %v426 = vshll.u32 920167782, %v411
        %v427 = vshrl.u32 1326507024, %v412
        %v428 = vor.u32 %v426, %v427
        %vm429 = vcmp.lt.s32.totalorder %v410, 1
        %vm430 = vcmp.lt.s32.totalorder %v410, 2
        %vm431 = vcmp.lt.s32.totalorder %v410, 3
        %vm432 = vcmp.lt.s32.totalorder %v410, 4
        %v433 = vsel %vm429, %v413, %v416
        %v434 = vsel %vm432, %v422, 2102212464
        %v435 = vsel %vm431, %v419, %v434
        %v436 = vsel %vm430, %v433, %v435
        %v437 = vsel %vm429, %v416, %v419
        %v438 = vsel %vm432, %v425, 920167782
        %v439 = vsel %vm431, %v422, %v438
        %v440 = vsel %vm430, %v437, %v439
        %v441 = vsel %vm429, %v419, %v422
        %v442 = vsel %vm432, %v428, 1326507024
        %v443 = vsel %vm431, %v425, %v442
        %v444 = vsel %vm430, %v441, %v443
        %v445 = vshll.u32 %v405, 8
        %v446 = vmul.u32.u64.compose %v445, %v444
        %v447 = vextract.low.u32 %v446
        %v448 = vextract.high.u32 %v446
        %v449 = vmul.u32.u64.compose %v445, %v440
        %v450 = vextract.low.u32 %v449
        %v451 = vextract.high.u32 %v449
        %v452 = vmul.u32 %v445, %v436
        %v453 = vadd.s32 %v448, %v450
        %vm454 = vc.u32 %v448, %v450
        %v455 = vadd.s32 %v451, 1
        %v456 = vsel %vm454, %v455, %v451
        %v457 = vadd.s32 %v452, %v456
        %v458 = vadd.s32 %v457, 536870912
        %v459 = vshrl.u32 %v458, 30
        %v460 = vshll.u32 %v459, 30
        %v461 = vsub.s32 %v457, %v460
        %vm462 = vcmp.lt.s32.totalorder %v461, 0
        %v463 = vsub.s32 0, %v461
        %v464 = vsel %vm462, %v463, %v461
        %v465 = vclz %v464
        %v466 = vsub.s32 %v465, 2
        %vm467 = vcmp.gt.s32.totalorder 0, %v466
        %v468 = vsel %vm467, 0, %v466
        %v469 = vsub.s32 32, %v468
        %v470 = vshll.u32 %v461, %v468
        %v471 = vshrl.u32 %v453, %v469
        %v472 = vor.u32 %v470, %v471
        %v473 = vsub.s32 4294967266, %v468
        %v474 = vadd.s32 %v473, 127
        %v475 = vshll.u32 %v474, 23
        %v476 = vor.u32 4788187, %v475
        %v477 = vand.u32 2147483647, %v476
        %v479 = vcvt.s32.f32 %v472
        %v480 = vmul.f32 %v479, %v477
        %v481 = vxor.u32 %v480, 2147483648
        %v482 = vsel %vm399, %v481, %v480
        %v483 = vsub.s32 4, %v459
        %v484 = vsel %vm399, %v483, %v459
        %v485 = vsel %vm398, %v392, %v482
        %v486 = vsel %vm398, 0, %v484
        %v487 = vcosq.f32.pop %v485
        %v488 = vsinq.f32.pop %v485
        %vm489 = vweird.f32 %v392
        %v490 = vadd.s32 %v486, 3
        %v491 = vand.u32 %v490, 3
        %vm492 = vcmp.lt.s32.totalorder %v491, 2
        %vm493 = vcmp.eq.s32.totalorder %v491, 0
        %v494 = vxor.u32 %v488, 2147483648
        %v495 = vsel %vm493, %v487, %v494
        %vm496 = vcmp.eq.s32.totalorder %v491, 2
        %v497 = vxor.u32 %v487, 2147483648
        %v498 = vsel %vm496, %v497, %v488
        %v499 = vsel %vm492, %v495, %v498
        %v500 = vsel %vm489, nan, %v499
        %v501 = vand.u32 2147483647, %v393
        %vm502 = vcmp.le.f32.partialorder %v501, 0.7853982
        %vm503 = vcmp.lt.s32.totalorder %v393, 0
        %v504 = vand.u32 %v393, 2139095040
        %v505 = vshrl.u32 %v504, 23
        %v506 = vsub.s32 %v505, 127
        %v507 = vand.u32 2147483647, %v393
        %v508 = vand.u32 %v507, 8388607
        %v509 = vor.u32 %v508, 8388608
        %v510 = vsub.s32 0, %v509
        %v511 = vadd.s32 %v506, 1
        %vm512 = vcmp.gt.s32.totalorder %v511, 0
        %v513 = vsel %vm512, %v511, 0
        %v514 = vshrl.u32 %v513, 5
        %v515 = vand.u32 %v513, 31
        %v516 = vsub.s32 32, %v515
        %v517 = vshrl.u32 683565275, %v516
        %v518 = vshll.u32 683565275, %v515
        %v519 = vshrl.u32 2475754826, %v516
        %v520 = vor.u32 %v518, %v519
        %v521 = vshll.u32 2475754826, %v515
        %v522 = vshrl.u32 2131351028, %v516
        %v523 = vor.u32 %v521, %v522
        %v524 = vshll.u32 2131351028, %v515
        %v525 = vshrl.u32 2102212464, %v516
        %v526 = vor.u32 %v524, %v525
        %v527 = vshll.u32 2102212464, %v515
        %v528 = vshrl.u32 920167782, %v516
        %v529 = vor.u32 %v527, %v528
        %v530 = vshll.u32 920167782, %v515
        %v531 = vshrl.u32 1326507024, %v516
        %v532 = vor.u32 %v530, %v531
        %vm533 = vcmp.lt.s32.totalorder %v514, 1
        %vm534 = vcmp.lt.s32.totalorder %v514, 2
        %vm535 = vcmp.lt.s32.totalorder %v514, 3
        %vm536 = vcmp.lt.s32.totalorder %v514, 4
        %v537 = vsel %vm533, %v517, %v520
        %v538 = vsel %vm536, %v526, 2102212464
        %v539 = vsel %vm535, %v523, %v538
        %v540 = vsel %vm534, %v537, %v539
        %v541 = vsel %vm533, %v520, %v523
        %v542 = vsel %vm536, %v529, 920167782
        %v543 = vsel %vm535, %v526, %v542
        %v544 = vsel %vm534, %v541, %v543
        %v545 = vsel %vm533, %v523, %v526
        %v546 = vsel %vm536, %v532, 1326507024
        %v547 = vsel %vm535, %v529, %v546
        %v548 = vsel %vm534, %v545, %v547
        %v549 = vshll.u32 %v509, 8
        %v550 = vmul.u32.u64.compose %v549, %v548
        %v551 = vextract.low.u32 %v550
        %v552 = vextract.high.u32 %v550
        %v553 = vmul.u32.u64.compose %v549, %v544
        %v554 = vextract.low.u32 %v553
        %v555 = vextract.high.u32 %v553
        %v556 = vmul.u32 %v549, %v540
        %v557 = vadd.s32 %v552, %v554
        %vm558 = vc.u32 %v552, %v554
        %v559 = vadd.s32 %v555, 1
        %v560 = vsel %vm558, %v559, %v555
        %v561 = vadd.s32 %v556, %v560
        %v562 = vadd.s32 %v561, 536870912
        %v563 = vshrl.u32 %v562, 30
        %v564 = vshll.u32 %v563, 30
        %v565 = vsub.s32 %v561, %v564
        %vm566 = vcmp.lt.s32.totalorder %v565, 0
        %v567 = vsub.s32 0, %v565
        %v568 = vsel %vm566, %v567, %v565
        %v569 = vclz %v568
        %v570 = vsub.s32 %v569, 2
        %vm571 = vcmp.gt.s32.totalorder 0, %v570
        %v572 = vsel %vm571, 0, %v570
        %v573 = vsub.s32 32, %v572
        %v574 = vshll.u32 %v565, %v572
        %v575 = vshrl.u32 %v557, %v573
        %v576 = vor.u32 %v574, %v575
        %v577 = vsub.s32 4294967266, %v572
        %v578 = vadd.s32 %v577, 127
        %v579 = vshll.u32 %v578, 23
        %v580 = vor.u32 4788187, %v579
        %v581 = vand.u32 2147483647, %v580
        %v583 = vcvt.s32.f32 %v576
        %v584 = vmul.f32 %v583, %v581
        %v585 = vxor.u32 %v584, 2147483648
        %v586 = vsel %vm503, %v585, %v584
        %v587 = vsub.s32 4, %v563
        %v588 = vsel %vm503, %v587, %v563
        %v589 = vsel %vm502, %v393, %v586
        %v590 = vsel %vm502, 0, %v588
        %v591 = vcosq.f32.pop %v589
        %v592 = vsinq.f32.pop %v589
        %vm593 = vweird.f32 %v393
        %v594 = vadd.s32 %v590, 3
        %v595 = vand.u32 %v594, 3
        %vm596 = vcmp.lt.s32.totalorder %v595, 2
        %vm597 = vcmp.eq.s32.totalorder %v595, 0
        %v598 = vxor.u32 %v592, 2147483648
        %v599 = vsel %vm597, %v591, %v598
        %vm600 = vcmp.eq.s32.totalorder %v595, 2
        %v601 = vxor.u32 %v591, 2147483648
        %v602 = vsel %vm600, %v601, %v592
        %v603 = vsel %vm596, %v599, %v602
        %v604 = vsel %vm593, nan, %v603
        %v605 = vand.u32 2147483647, %v394
        %vm606 = vcmp.le.f32.partialorder %v605, 0.7853982
        %vm607 = vcmp.lt.s32.totalorder %v394, 0
        %v608 = vand.u32 %v394, 2139095040
        %v609 = vshrl.u32 %v608, 23
        %v610 = vsub.s32 %v609, 127
        %v611 = vand.u32 2147483647, %v394
        %v612 = vand.u32 %v611, 8388607
        %v613 = vor.u32 %v612, 8388608
        %v614 = vsub.s32 0, %v613
        %v615 = vadd.s32 %v610, 1
        %vm616 = vcmp.gt.s32.totalorder %v615, 0
        %v617 = vsel %vm616, %v615, 0
        %v618 = vshrl.u32 %v617, 5
        %v619 = vand.u32 %v617, 31
        %v620 = vsub.s32 32, %v619
        %v621 = vshrl.u32 683565275, %v620
        %v622 = vshll.u32 683565275, %v619
        %v623 = vshrl.u32 2475754826, %v620
        %v624 = vor.u32 %v622, %v623
        %v625 = vshll.u32 2475754826, %v619
        %v626 = vshrl.u32 2131351028, %v620
        %v627 = vor.u32 %v625, %v626
        %v628 = vshll.u32 2131351028, %v619
        %v629 = vshrl.u32 2102212464, %v620
        %v630 = vor.u32 %v628, %v629
        %v631 = vshll.u32 2102212464, %v619
        %v632 = vshrl.u32 920167782, %v620
        %v633 = vor.u32 %v631, %v632
        %v634 = vshll.u32 920167782, %v619
        %v635 = vshrl.u32 1326507024, %v620
        %v636 = vor.u32 %v634, %v635
        %vm637 = vcmp.lt.s32.totalorder %v618, 1
        %vm638 = vcmp.lt.s32.totalorder %v618, 2
        %vm639 = vcmp.lt.s32.totalorder %v618, 3
        %vm640 = vcmp.lt.s32.totalorder %v618, 4
        %v641 = vsel %vm637, %v621, %v624
        %v642 = vsel %vm640, %v630, 2102212464
        %v643 = vsel %vm639, %v627, %v642
        %v644 = vsel %vm638, %v641, %v643
        %v645 = vsel %vm637, %v624, %v627
        %v646 = vsel %vm640, %v633, 920167782
        %v647 = vsel %vm639, %v630, %v646
        %v648 = vsel %vm638, %v645, %v647
        %v649 = vsel %vm637, %v627, %v630
        %v650 = vsel %vm640, %v636, 1326507024
        %v651 = vsel %vm639, %v633, %v650
        %v652 = vsel %vm638, %v649, %v651
        %v653 = vshll.u32 %v613, 8
        %v654 = vmul.u32.u64.compose %v653, %v652
        %v655 = vextract.low.u32 %v654
        %v656 = vextract.high.u32 %v654
        %v657 = vmul.u32.u64.compose %v653, %v648
        %v658 = vextract.low.u32 %v657
        %v659 = vextract.high.u32 %v657
        %v660 = vmul.u32 %v653, %v644
        %v661 = vadd.s32 %v656, %v658
        %vm662 = vc.u32 %v656, %v658
        %v663 = vadd.s32 %v659, 1
        %v664 = vsel %vm662, %v663, %v659
        %v665 = vadd.s32 %v660, %v664
        %v666 = vadd.s32 %v665, 536870912
        %v667 = vshrl.u32 %v666, 30
        %v668 = vshll.u32 %v667, 30
        %v669 = vsub.s32 %v665, %v668
        %vm670 = vcmp.lt.s32.totalorder %v669, 0
        %v671 = vsub.s32 0, %v669
        %v672 = vsel %vm670, %v671, %v669
        %v673 = vclz %v672
        %v674 = vsub.s32 %v673, 2
        %vm675 = vcmp.gt.s32.totalorder 0, %v674
        %v676 = vsel %vm675, 0, %v674
        %v677 = vsub.s32 32, %v676
        %v678 = vshll.u32 %v669, %v676
        %v679 = vshrl.u32 %v661, %v677
        %v680 = vor.u32 %v678, %v679
        %v681 = vsub.s32 4294967266, %v676
        %v682 = vadd.s32 %v681, 127
        %v683 = vshll.u32 %v682, 23
        %v684 = vor.u32 4788187, %v683
        %v685 = vand.u32 2147483647, %v684
        %v687 = vcvt.s32.f32 %v680
        %v688 = vmul.f32 %v687, %v685
        %v689 = vxor.u32 %v688, 2147483648
        %v690 = vsel %vm607, %v689, %v688
        %v691 = vsub.s32 4, %v667
        %v692 = vsel %vm607, %v691, %v667
        %v693 = vsel %vm606, %v394, %v690
        %v694 = vsel %vm606, 0, %v692
        %v695 = vcosq.f32.pop %v693
        %v696 = vsinq.f32.pop %v693
        %vm697 = vweird.f32 %v394
        %v698 = vadd.s32 %v694, 3
        %v699 = vand.u32 %v698, 3
        %vm700 = vcmp.lt.s32.totalorder %v699, 2
        %vm701 = vcmp.eq.s32.totalorder %v699, 0
        %v702 = vxor.u32 %v696, 2147483648
        %v703 = vsel %vm701, %v695, %v702
        %vm704 = vcmp.eq.s32.totalorder %v699, 2
        %v705 = vxor.u32 %v695, 2147483648
        %v706 = vsel %vm704, %v705, %v696
        %v707 = vsel %vm700, %v703, %v706
        %v708 = vsel %vm697, nan, %v707
        %v709 = vand.u32 2147483647, %v395
        %vm710 = vcmp.le.f32.partialorder %v709, 0.7853982
        %vm711 = vcmp.lt.s32.totalorder %v395, 0
        %v712 = vand.u32 %v395, 2139095040
        %v713 = vshrl.u32 %v712, 23
        %v714 = vsub.s32 %v713, 127
        %v715 = vand.u32 2147483647, %v395
        %v716 = vand.u32 %v715, 8388607
        %v717 = vor.u32 %v716, 8388608
        %v718 = vsub.s32 0, %v717
        %v719 = vadd.s32 %v714, 1
        %vm720 = vcmp.gt.s32.totalorder %v719, 0
        %v721 = vsel %vm720, %v719, 0
        %v722 = vshrl.u32 %v721, 5
        %v723 = vand.u32 %v721, 31
        %v724 = vsub.s32 32, %v723
        %v725 = vshrl.u32 683565275, %v724
        %v726 = vshll.u32 683565275, %v723
        %v727 = vshrl.u32 2475754826, %v724
        %v728 = vor.u32 %v726, %v727
        %v729 = vshll.u32 2475754826, %v723
        %v730 = vshrl.u32 2131351028, %v724
        %v731 = vor.u32 %v729, %v730
        %v732 = vshll.u32 2131351028, %v723
        %v733 = vshrl.u32 2102212464, %v724
        %v734 = vor.u32 %v732, %v733
        %v735 = vshll.u32 2102212464, %v723
        %v736 = vshrl.u32 920167782, %v724
        %v737 = vor.u32 %v735, %v736
        %v738 = vshll.u32 920167782, %v723
        %v739 = vshrl.u32 1326507024, %v724
        %v740 = vor.u32 %v738, %v739
        %vm741 = vcmp.lt.s32.totalorder %v722, 1
        %vm742 = vcmp.lt.s32.totalorder %v722, 2
        %vm743 = vcmp.lt.s32.totalorder %v722, 3
        %vm744 = vcmp.lt.s32.totalorder %v722, 4
        %v745 = vsel %vm741, %v725, %v728
        %v746 = vsel %vm744, %v734, 2102212464
        %v747 = vsel %vm743, %v731, %v746
        %v748 = vsel %vm742, %v745, %v747
        %v749 = vsel %vm741, %v728, %v731
        %v750 = vsel %vm744, %v737, 920167782
        %v751 = vsel %vm743, %v734, %v750
        %v752 = vsel %vm742, %v749, %v751
        %v753 = vsel %vm741, %v731, %v734
        %v754 = vsel %vm744, %v740, 1326507024
        %v755 = vsel %vm743, %v737, %v754
        %v756 = vsel %vm742, %v753, %v755
        %v757 = vshll.u32 %v717, 8
        %v758 = vmul.u32.u64.compose %v757, %v756
        %v759 = vextract.low.u32 %v758
        %v760 = vextract.high.u32 %v758
        %v761 = vmul.u32.u64.compose %v757, %v752
        %v762 = vextract.low.u32 %v761
        %v763 = vextract.high.u32 %v761
        %v764 = vmul.u32 %v757, %v748
        %v765 = vadd.s32 %v760, %v762
        %vm766 = vc.u32 %v760, %v762
        %v767 = vadd.s32 %v763, 1
        %v768 = vsel %vm766, %v767, %v763
        %v769 = vadd.s32 %v764, %v768
        %v770 = vadd.s32 %v769, 536870912
        %v771 = vshrl.u32 %v770, 30
        %v772 = vshll.u32 %v771, 30
        %v773 = vsub.s32 %v769, %v772
        %vm774 = vcmp.lt.s32.totalorder %v773, 0
        %v775 = vsub.s32 0, %v773
        %v776 = vsel %vm774, %v775, %v773
        %v777 = vclz %v776
        %v778 = vsub.s32 %v777, 2
        %vm779 = vcmp.gt.s32.totalorder 0, %v778
        %v780 = vsel %vm779, 0, %v778
        %v781 = vsub.s32 32, %v780
        %v782 = vshll.u32 %v773, %v780
        %v783 = vshrl.u32 %v765, %v781
        %v784 = vor.u32 %v782, %v783
        %v785 = vsub.s32 4294967266, %v780
        %v786 = vadd.s32 %v785, 127
        %v787 = vshll.u32 %v786, 23
        %v788 = vor.u32 4788187, %v787
        %v789 = vand.u32 2147483647, %v788
        %v791 = vcvt.s32.f32 %v784
        %v792 = vmul.f32 %v791, %v789
        %v793 = vxor.u32 %v792, 2147483648
        %v794 = vsel %vm711, %v793, %v792
        %v795 = vsub.s32 4, %v771
        %v796 = vsel %vm711, %v795, %v771
        %v797 = vsel %vm710, %v395, %v794
        %v798 = vsel %vm710, 0, %v796
        %v799 = vcosq.f32.pop %v797
        %v800 = vsinq.f32.pop %v797
        %vm801 = vweird.f32 %v395
        %v802 = vadd.s32 %v798, 3
        %v803 = vand.u32 %v802, 3
        %vm804 = vcmp.lt.s32.totalorder %v803, 2
        %vm805 = vcmp.eq.s32.totalorder %v803, 0
        %v806 = vxor.u32 %v800, 2147483648
        %v807 = vsel %vm805, %v799, %v806
        %vm808 = vcmp.eq.s32.totalorder %v803, 2
        %v809 = vxor.u32 %v799, 2147483648
        %v810 = vsel %vm808, %v809, %v800
        %v811 = vsel %vm804, %v807, %v810
        %v812 = vsel %vm801, nan, %v811
        %v813 = vand.u32 2147483647, %v396
        %vm814 = vcmp.le.f32.partialorder %v813, 0.7853982
        %vm815 = vcmp.lt.s32.totalorder %v396, 0
        %v816 = vand.u32 %v396, 2139095040
        %v817 = vshrl.u32 %v816, 23
        %v818 = vsub.s32 %v817, 127
        %v819 = vand.u32 2147483647, %v396
        %v820 = vand.u32 %v819, 8388607
        %v821 = vor.u32 %v820, 8388608
        %v822 = vsub.s32 0, %v821
        %v823 = vadd.s32 %v818, 1
        %vm824 = vcmp.gt.s32.totalorder %v823, 0
        %v825 = vsel %vm824, %v823, 0
        %v826 = vshrl.u32 %v825, 5
        %v827 = vand.u32 %v825, 31
        %v828 = vsub.s32 32, %v827
        %v829 = vshrl.u32 683565275, %v828
        %v830 = vshll.u32 683565275, %v827
        %v831 = vshrl.u32 2475754826, %v828
        %v832 = vor.u32 %v830, %v831
        %v833 = vshll.u32 2475754826, %v827
        %v834 = vshrl.u32 2131351028, %v828
        %v835 = vor.u32 %v833, %v834
        %v836 = vshll.u32 2131351028, %v827
        %v837 = vshrl.u32 2102212464, %v828
        %v838 = vor.u32 %v836, %v837
        %v839 = vshll.u32 2102212464, %v827
        %v840 = vshrl.u32 920167782, %v828
        %v841 = vor.u32 %v839, %v840
        %v842 = vshll.u32 920167782, %v827
        %v843 = vshrl.u32 1326507024, %v828
        %v844 = vor.u32 %v842, %v843
        %vm845 = vcmp.lt.s32.totalorder %v826, 1
        %vm846 = vcmp.lt.s32.totalorder %v826, 2
        %vm847 = vcmp.lt.s32.totalorder %v826, 3
        %vm848 = vcmp.lt.s32.totalorder %v826, 4
        %v849 = vsel %vm845, %v829, %v832
        %v850 = vsel %vm848, %v838, 2102212464
        %v851 = vsel %vm847, %v835, %v850
        %v852 = vsel %vm846, %v849, %v851
        %v853 = vsel %vm845, %v832, %v835
        %v854 = vsel %vm848, %v841, 920167782
        %v855 = vsel %vm847, %v838, %v854
        %v856 = vsel %vm846, %v853, %v855
        %v857 = vsel %vm845, %v835, %v838
        %v858 = vsel %vm848, %v844, 1326507024
        %v859 = vsel %vm847, %v841, %v858
        %v860 = vsel %vm846, %v857, %v859
        %v861 = vshll.u32 %v821, 8
        %v862 = vmul.u32.u64.compose %v861, %v860
        %v863 = vextract.low.u32 %v862
        %v864 = vextract.high.u32 %v862
        %v865 = vmul.u32.u64.compose %v861, %v856
        %v866 = vextract.low.u32 %v865
        %v867 = vextract.high.u32 %v865
        %v868 = vmul.u32 %v861, %v852
        %v869 = vadd.s32 %v864, %v866
        %vm870 = vc.u32 %v864, %v866
        %v871 = vadd.s32 %v867, 1
        %v872 = vsel %vm870, %v871, %v867
        %v873 = vadd.s32 %v868, %v872
        %v874 = vadd.s32 %v873, 536870912
        %v875 = vshrl.u32 %v874, 30
        %v876 = vshll.u32 %v875, 30
        %v877 = vsub.s32 %v873, %v876
        %vm878 = vcmp.lt.s32.totalorder %v877, 0
        %v879 = vsub.s32 0, %v877
        %v880 = vsel %vm878, %v879, %v877
        %v881 = vclz %v880
        %v882 = vsub.s32 %v881, 2
        %vm883 = vcmp.gt.s32.totalorder 0, %v882
        %v884 = vsel %vm883, 0, %v882
        %v885 = vsub.s32 32, %v884
        %v886 = vshll.u32 %v877, %v884
        %v887 = vshrl.u32 %v869, %v885
        %v888 = vor.u32 %v886, %v887
        %v889 = vsub.s32 4294967266, %v884
        %v890 = vadd.s32 %v889, 127
        %v891 = vshll.u32 %v890, 23
        %v892 = vor.u32 4788187, %v891
        %v893 = vand.u32 2147483647, %v892
        %v895 = vcvt.s32.f32 %v888
        %v896 = vmul.f32 %v895, %v893
        %v897 = vxor.u32 %v896, 2147483648
        %v898 = vsel %vm815, %v897, %v896
        %v899 = vsub.s32 4, %v875
        %v900 = vsel %vm815, %v899, %v875
        %v901 = vsel %vm814, %v396, %v898
        %v902 = vsel %vm814, 0, %v900
        %v903 = vcosq.f32.pop %v901
        %v904 = vsinq.f32.pop %v901
        %vm905 = vweird.f32 %v396
        %v906 = vadd.s32 %v902, 3
        %v907 = vand.u32 %v906, 3
        %vm908 = vcmp.lt.s32.totalorder %v907, 2
        %vm909 = vcmp.eq.s32.totalorder %v907, 0
        %v910 = vxor.u32 %v904, 2147483648
        %v911 = vsel %vm909, %v903, %v910
        %vm912 = vcmp.eq.s32.totalorder %v907, 2
        %v913 = vxor.u32 %v903, 2147483648
        %v914 = vsel %vm912, %v913, %v904
        %v915 = vsel %vm908, %v911, %v914
        %v916 = vsel %vm905, nan, %v915
        %917 = vst [vmem:[%s237] sm:$0xff] %v500
        %918 = vst [vmem:[%s237 + $0x8] sm:$0xff] %v604
        %919 = vst [vmem:[%s237 + $0x10] sm:$0xff] %v708
        %920 = vst [vmem:[%s237 + $0x18] sm:$0xff] %v812
        %vm921 = vcmask 130048
        %922 = vst.msk [vmem:[%s237 + $0x20] sm:$0xff] %vm921, %v916
        %s923 = sand.u32 %s153, 1
        %s924 = scalar_lea.sflag [#allocation3], %s923
        %s925 = sand.u32 %s153, 1
        %s926 = smul.addr %s925, 40
        %s927 = scalar_lea.vmem [#allocation2], %s926
        // Predicated region
        $region41: #{tpu_custom_call.1} parent=39 // pred_check
          %p928 = pneg %p163
        $region42: #{tpu_custom_call.1} parent=39 // pred_check_branch
          %930 = sbr.rel (%p928) target = $region44
        $region43: #{tpu_custom_call.1} parent=39 // pred_region
          %s932 = ssub.s32 640, 640
          %933 = vsyncadd %s924, %s932
          %s934 = smul.addr %s24, 5
          %s935 = smul.addr %s23, 5
          %s936 = sadd.s32 %s934, %s935
          %s937 = smul.addr %s936, 128
          %s938 = scalar_lea.hbm %s5, %s937
          %s940 = sshll.u32 %s927, 4
          %s941 = int_to_ptr.vmem [resolvable:$true] %s940
          %943 = dma.vmem_to_hbm [thread:$0]  %s941, 640, %s938, %s924
        $region44: #{tpu_custom_call.1} parent=39 // pred_fallthru
          _
      $region40: #{tpu_custom_call.1} parent=5 // pred_fallthru
        _
      %p944 = scmp.le.s32.totalorder 2, %s14
      // Predicated region
      $region45: #{tpu_custom_call.1} parent=5 // pred_check
        %p945 = pneg %p944
      $region46: #{tpu_custom_call.1} parent=5 // pred_check_branch
        %947 = sbr.rel (%p945) target = $region48
      $region47: #{tpu_custom_call.1} parent=5 // pred_region
        %s948 = ssub.s32 %s14, 2
        // Predicated region
        $region49: #{tpu_custom_call.1} parent=47 // pred_check
          %p949 = pneg %p169
        $region50: #{tpu_custom_call.1} parent=47 // pred_check_branch
          %951 = sbr.rel (%p949) target = $region52
        $region51: #{tpu_custom_call.1} parent=47 // pred_region
          %s952 = sand.u32 %s154, 1
          %s953 = scalar_lea.sflag [#allocation3], %s952
          %s954 = sand.u32 %s154, 1
          %s955 = smul.addr %s954, 40
          %s956 = scalar_lea.vmem [#allocation2], %s955
          %957 = dma.done %s953, 640
        $region52: #{tpu_custom_call.1} parent=47 // pred_fallthru
          _
      $region48: #{tpu_custom_call.1} parent=5 // pred_fallthru
        _
    $region6: #{tpu_custom_call.1} parent=1 // loop_footer
      %s18 = sadd.s32 1, %s14
    $region7: #{tpu_custom_call.1} parent=1 // loop_footer_branch
      %13 = sbr.rel target = $region3
    $region8: #{tpu_custom_call.1} parent=1 // loop_exit
      _
    %958 = vsyncpa [#allocation3], 1
    %s959 = scalar_lea.sflag [#allocation3], 1
    %960 = vsyncpa %s959, 1

</llo_original>
